<compile_context>
chip_gen: v5e
topology: v5e:2x2
jax: 0.10.0
libtpu: 0.0.40
codegen_flags: <defaults>
</compile_context>

<pallas_src>
import functools

import jax
import jax.numpy as jnp
from jax.experimental import pallas as pl
from jax.experimental.pallas import tpu as pltpu


def _ntxent_kernel(d_ref, t_ref, out_ref,
                   m_ref, l_ref, row_acc_ref, diag_acc_ref,
                   *, inv_temp: float, batch: int, block_m: int):
    # d_ref: (block_m, D) tile of dance embeddings (current row block)
    # t_ref: (B, D) full text embeddings (resident across all steps)
    # out_ref: (3,) SMEM -> [total, dance_to_text, text_to_dance]
    # m_ref, l_ref: (1, B) running column max / scaled column exp-sum
    # row_acc_ref, diag_acc_ref: (1, 1) scalar accumulators
    step = pl.program_id(0)
    n_steps = pl.num_programs(0)

    @pl.when(step == 0)
    def _init():
        m_ref[...] = jnp.full_like(m_ref, -jnp.inf)
        l_ref[...] = jnp.zeros_like(l_ref)
        row_acc_ref[...] = jnp.zeros_like(row_acc_ref)
        diag_acc_ref[...] = jnp.zeros_like(diag_acc_ref)

    # Fold 1/temperature into the (smaller) lhs operand before the MXU matmul.
    d_scaled = d_ref[...] * jnp.asarray(inv_temp, dtype=d_ref.dtype)

    # sim[i, j] = <d_scaled[i], t[j]> — contract on the embedding dim directly,
    # no transposed copy of t is materialized.  f32 accumulation on the MXU.
    sim = jax.lax.dot_general(
        d_scaled, t_ref[...],
        dimension_numbers=(((1,), (1,)), ((), ())),
        preferred_element_type=jnp.float32)              # (block_m, B) f32

    # Diagonal logits for this row block computed directly from the embeddings
    # (O(block_m * D) VPU work instead of a masked select over (block_m, B)).
    start = pl.multiple_of(step * block_m, block_m)
    t_blk = t_ref[pl.ds(start, block_m), :]
    diag = jnp.sum(d_scaled.astype(jnp.float32) * t_blk.astype(jnp.float32),
                   axis=-1, keepdims=True)               # (block_m, 1)

    # dance -> text: per-row logsumexp, complete within this row block.
    row_max = jnp.max(sim, axis=-1, keepdims=True)
    row_lse = row_max + jnp.log(
        jnp.sum(jnp.exp(sim - row_max), axis=-1, keepdims=True))
    row_acc_ref[...] += jnp.sum(row_lse - diag, keepdims=True)
    diag_acc_ref[...] += jnp.sum(diag, keepdims=True)

    # text -> dance: flash-style online column logsumexp across row blocks.
    m_prev = m_ref[...]
    col_max = jnp.max(sim, axis=0, keepdims=True)        # (1, B)
    m_new = jnp.maximum(m_prev, col_max)
    l_ref[...] = (l_ref[...] * jnp.exp(m_prev - m_new)
                  + jnp.sum(jnp.exp(sim - m_new), axis=0, keepdims=True))
    m_ref[...] = m_new

    @pl.when(step == n_steps - 1)
    def _finalize():
        inv_b = jnp.float32(1.0 / batch)
        d2t = jnp.sum(row_acc_ref[...]) * inv_b
        col_lse = m_ref[...] + jnp.log(l_ref[...])        # (1, B)
        t2d = (jnp.sum(col_lse) - jnp.sum(diag_acc_ref[...])) * inv_b
        out_ref[0] = 0.5 * (d2t + t2d)
        out_ref[1] = d2t
        out_ref[2] = t2d


def _pick_block_m(batch: int, itemsize: int) -> int:
    # sublane packing: 8 rows for f32, 16 for bf16, 32 for int8/fp8
    packing = max(1, 4 // max(1, itemsize))
    min_tile = 8 * packing
    for bm in (256, 128, 64, 32, 16, 8):
        if min_tile <= bm <= batch and batch % bm == 0:
            return bm
    return batch  # single block covering the whole batch


@functools.partial(jax.jit, static_argnames=("temperature", "block_m"))
def ntxent_loss(dance_embeddings, text_embeddings, temperature: float = 0.07,
                block_m=None):
    """Returns (total_loss, dance_to_text_loss, text_to_dance_loss), f32 scalars.

    Matches the PyTorch spec: similarity = dance @ text.T / temperature,
    cross-entropy over rows (dance->text) and columns (text->dance) with
    diagonal labels, averaged.
    """
    assert dance_embeddings.shape == text_embeddings.shape
    B, D = dance_embeddings.shape
    itemsize = jnp.dtype(dance_embeddings.dtype).itemsize
    if block_m is None:
        block_m = _pick_block_m(B, itemsize)
    assert B % block_m == 0, "block_m must evenly divide the batch size"
    n_blocks = B // block_m

    kernel = functools.partial(
        _ntxent_kernel,
        inv_temp=float(1.0 / temperature),
        batch=B,
        block_m=block_m)

    cost = pl.CostEstimate(
        flops=2 * B * B * D + 2 * B * D,
        transcendentals=2 * B * B,
        bytes_accessed=2 * B * D * itemsize + 3 * 4)

    out = pl.pallas_call(
        kernel,
        out_shape=jax.ShapeDtypeStruct((3,), jnp.float32),
        grid_spec=pltpu.PrefetchScalarGridSpec(
            num_scalar_prefetch=0,
            grid=(n_blocks,),
            in_specs=[
                pl.BlockSpec((block_m, D), lambda i: (i, 0)),   # dance row tiles
                pl.BlockSpec((B, D), lambda i: (0, 0)),         # full text (resident)
            ],
            out_specs=pl.BlockSpec(memory_space=pltpu.SMEM),
            scratch_shapes=[
                pltpu.VMEM((1, B), jnp.float32),   # running column max
                pltpu.VMEM((1, B), jnp.float32),   # running column exp-sum
                pltpu.VMEM((1, 1), jnp.float32),   # sum(row_lse - diag)
                pltpu.VMEM((1, 1), jnp.float32),   # sum(diag)
            ]),
        compiler_params=pltpu.CompilerParams(
            dimension_semantics=("arbitrary",),     # grid axis carries reductions
            vmem_limit_bytes=32 * 1024 * 1024),
        cost_estimate=cost,
    )(dance_embeddings, text_embeddings)

    return out[0], out[1], out[2]


def _reference(dance, text, temperature=0.07):
    # plain-JAX reference (mirrors the PyTorch module)
    sim = (dance.astype(jnp.float32) @ text.astype(jnp.float32).T) / temperature
    labels = jnp.arange(sim.shape[0])
    logp_rows = jax.nn.log_softmax(sim, axis=-1)
    logp_cols = jax.nn.log_softmax(sim.T, axis=-1)
    d2t = -jnp.mean(logp_rows[labels, labels])
    t2d = -jnp.mean(logp_cols[labels, labels])
    return (d2t + t2d) / 2, d2t, t2d


if __name__ == "__main__":
    key = jax.random.PRNGKey(0)
    k1, k2, k3, k4 = jax.random.split(key, 4)

    # Case 1: small shape straight from the module spec (single row block).
    batch, dim = 8, 32
    dance = jax.random.normal(k1, (batch, dim), dtype=jnp.float32)
    text = jax.random.normal(k2, (batch, dim), dtype=jnp.float32)

    total, d2t, t2d = ntxent_loss(dance, text, temperature=0.07)
    jax.block_until_ready(total)

    ref_total, ref_d2t, ref_t2d = _reference(dance, text, 0.07)
    assert jnp.allclose(total, ref_total, atol=1e-3, rtol=1e-3)
    assert jnp.allclose(d2t, ref_d2t, atol=1e-3, rtol=1e-3)
    assert jnp.allclose(t2d, ref_t2d, atol=1e-3, rtol=1e-3)

    # Case 2: exercise the multi-block (online column-LSE) path with forced tiling.
    batch2, dim2 = 32, 128
    d2 = jax.random.normal(k3, (batch2, dim2), dtype=jnp.float32)
    t2 = jax.random.normal(k4, (batch2, dim2), dtype=jnp.float32)
    d2 = d2 / jnp.linalg.norm(d2, axis=-1, keepdims=True)
    t2 = t2 / jnp.linalg.norm(t2, axis=-1, keepdims=True)

    total2, d2t2, t2d2 = ntxent_loss(d2, t2, temperature=0.07, block_m=8)
    jax.block_until_ready(total2)

    r_total2, r_d2t2, r_t2d2 = _reference(d2, t2, 0.07)
    assert jnp.allclose(total2, r_total2, atol=1e-3, rtol=1e-3)
    assert jnp.allclose(d2t2, r_d2t2, atol=1e-3, rtol=1e-3)
    assert jnp.allclose(t2d2, r_t2d2, atol=1e-3, rtol=1e-3)

    print("KERNEL_OK")
</pallas_src>

<mosaic_0001>
module attributes {stable_mosaic.version = 11 : i64} {
  func.func @_ntxent_kernel(%arg0: i32, %arg1: memref<8x32xf32, #tpu.memory_space<vmem>>, %arg2: memref<8x32xf32, #tpu.memory_space<vmem>>, %arg3: memref<3xf32, #tpu.memory_space<smem>>, %arg4: memref<1x8xf32, #tpu.memory_space<vmem>>, %arg5: memref<1x8xf32, #tpu.memory_space<vmem>>, %arg6: memref<1x1xf32, #tpu.memory_space<vmem>>, %arg7: memref<1x1xf32, #tpu.memory_space<vmem>>) attributes {dimension_semantics = [#tpu.dimension_semantics<arbitrary>], iteration_bounds = array<i64: 1>, scalar_prefetch = 0 : i64, scratch_operands = 4 : i64, tpu.core_type = #tpu.core_type<tc>, window_params = [{transform_indices = @transform_0, window_bounds = array<i64: 8, 32>}, {pipeline_mode = #tpu.pipeline_mode<synchronous>, transform_indices = @transform_1, window_bounds = array<i64: 8, 32>}, {transform_indices = @transform_2, window_bounds = array<i64: 3>}]} {
    %c0_i32 = arith.constant 0 : i32
    %0 = arith.cmpi eq, %arg0, %c0_i32 : i32
    %1 = arith.extui %0 : i1 to i32
    %c0_i32_0 = arith.constant 0 : i32
    %2 = arith.cmpi ne, %1, %c0_i32_0 : i32
    scf.if %2 {
      %cst_31 = arith.constant 0xFF800000 : f32
      %60 = vector.broadcast %cst_31 : f32 to vector<1x8xf32>
      %c0_32 = arith.constant 0 : index
      %c0_33 = arith.constant 0 : index
      %61 = vector.load %arg4[%c0_32, %c0_33] : memref<1x8xf32, #tpu.memory_space<vmem>>, vector<1x8xf32>
      tpu.vector_store %arg4[%c0_32, %c0_33], %60 {strides = array<i32>} : memref<1x8xf32, #tpu.memory_space<vmem>>, vector<1x8xf32>,
      %cst_34 = arith.constant 0.000000e+00 : f32
      %62 = vector.broadcast %cst_34 : f32 to vector<1x8xf32>
      %c0_35 = arith.constant 0 : index
      %c0_36 = arith.constant 0 : index
      %63 = vector.load %arg5[%c0_35, %c0_36] : memref<1x8xf32, #tpu.memory_space<vmem>>, vector<1x8xf32>
      tpu.vector_store %arg5[%c0_35, %c0_36], %62 {strides = array<i32>} : memref<1x8xf32, #tpu.memory_space<vmem>>, vector<1x8xf32>,
      %cst_37 = arith.constant 0.000000e+00 : f32
      %64 = vector.broadcast %cst_37 : f32 to vector<1x1xf32>
      %c0_38 = arith.constant 0 : index
      %c0_39 = arith.constant 0 : index
      %65 = vector.load %arg6[%c0_38, %c0_39] : memref<1x1xf32, #tpu.memory_space<vmem>>, vector<1x1xf32>
      tpu.vector_store %arg6[%c0_38, %c0_39], %64 {strides = array<i32>} : memref<1x1xf32, #tpu.memory_space<vmem>>, vector<1x1xf32>,
      %cst_40 = arith.constant 0.000000e+00 : f32
      %66 = vector.broadcast %cst_40 : f32 to vector<1x1xf32>
      %c0_41 = arith.constant 0 : index
      %c0_42 = arith.constant 0 : index
      %67 = vector.load %arg7[%c0_41, %c0_42] : memref<1x1xf32, #tpu.memory_space<vmem>>, vector<1x1xf32>
      tpu.vector_store %arg7[%c0_41, %c0_42], %66 {strides = array<i32>} : memref<1x1xf32, #tpu.memory_space<vmem>>, vector<1x1xf32>,
    } else {
    }
    %c0 = arith.constant 0 : index
    %c0_1 = arith.constant 0 : index
    %3 = vector.load %arg1[%c0, %c0_1] : memref<8x32xf32, #tpu.memory_space<vmem>>, vector<8x32xf32>
    %cst = arith.constant 14.2857141 : f32
    %4 = vector.broadcast %cst : f32 to vector<8x32xf32>
    %5 = arith.mulf %3, %4 : vector<8x32xf32>
    %c0_2 = arith.constant 0 : index
    %c0_3 = arith.constant 0 : index
    %6 = vector.load %arg2[%c0_2, %c0_3] : memref<8x32xf32, #tpu.memory_space<vmem>>, vector<8x32xf32>
    %cst_4 = arith.constant dense<0.000000e+00> : vector<8x8xf32>
    %7 = tpu.matmul %5, %6, %cst_4 {dimension_numbers = #tpu.dot_dimension_numbers<[1], [1], [0], [0], [0, 0, 1, 0], [], []>} : vector<8x32xf32>, vector<8x32xf32>, vector<8x8xf32> -> vector<8x8xf32>
    %c8_i32 = arith.constant 8 : i32
    %8 = arith.muli %arg0, %c8_i32 : i32
    %9 = tpu.assume_multiple %8, 8 : i32
    %10 = arith.index_cast %9 : i32 to index
    %c0_5 = arith.constant 0 : index
    %11 = vector.load %arg2[%10, %c0_5] : memref<8x32xf32, #tpu.memory_space<vmem>>, vector<8x32xf32>
    %12 = arith.mulf %5, %11 : vector<8x32xf32>
    %cst_6 = arith.constant dense<0.000000e+00> : vector<8xf32>
    %13 = vector.multi_reduction <add>, %12, %cst_6 [1] : vector<8x32xf32> to vector<8xf32>
    %14 = vector.shape_cast %13 : vector<8xf32> to vector<8x1xf32>
    %cst_7 = arith.constant dense<0xFF800000> : vector<8xf32>
    %15 = vector.multi_reduction <maximumf>, %7, %cst_7 [1] : vector<8x8xf32> to vector<8xf32>
    %16 = vector.shape_cast %15 : vector<8xf32> to vector<8x1xf32>
    %17 = vector.broadcast %16 : vector<8x1xf32> to vector<8x8xf32>
    %18 = arith.subf %7, %17 : vector<8x8xf32>
    %19 = math.exp %18 : vector<8x8xf32>
    %cst_8 = arith.constant dense<0.000000e+00> : vector<8xf32>
    %20 = vector.multi_reduction <add>, %19, %cst_8 [1] : vector<8x8xf32> to vector<8xf32>
    %21 = vector.shape_cast %20 : vector<8xf32> to vector<8x1xf32>
    %22 = math.log %21 : vector<8x1xf32>
    %23 = arith.addf %16, %22 : vector<8x1xf32>
    %c0_9 = arith.constant 0 : index
    %c0_10 = arith.constant 0 : index
    %24 = vector.load %arg6[%c0_9, %c0_10] : memref<1x1xf32, #tpu.memory_space<vmem>>, vector<1x1xf32>
    %25 = arith.subf %23, %14 : vector<8x1xf32>
    %26 = vector.shape_cast %25 : vector<8x1xf32> to vector<1x8x1xf32>
    %cst_11 = arith.constant dense<0.000000e+00> : vector<1xf32>
    %27 = vector.multi_reduction <add>, %26, %cst_11 [1, 2] : vector<1x8x1xf32> to vector<1xf32>
    %28 = vector.shape_cast %27 : vector<1xf32> to vector<1x1x1xf32>
    %29 = vector.extract %28[0, 0, 0] : f32 from vector<1x1x1xf32>
    %30 = vector.broadcast %29 : f32 to vector<1x1xf32>
    %31 = arith.addf %24, %30 : vector<1x1xf32>
    %c0_12 = arith.constant 0 : index
    %c0_13 = arith.constant 0 : index
    %32 = vector.load %arg6[%c0_12, %c0_13] : memref<1x1xf32, #tpu.memory_space<vmem>>, vector<1x1xf32>
    tpu.vector_store %arg6[%c0_12, %c0_13], %31 {strides = array<i32>} : memref<1x1xf32, #tpu.memory_space<vmem>>, vector<1x1xf32>,
    %c0_14 = arith.constant 0 : index
    %c0_15 = arith.constant 0 : index
    %33 = vector.load %arg7[%c0_14, %c0_15] : memref<1x1xf32, #tpu.memory_space<vmem>>, vector<1x1xf32>
    %34 = vector.shape_cast %14 : vector<8x1xf32> to vector<1x8x1xf32>
    %cst_16 = arith.constant dense<0.000000e+00> : vector<1xf32>
    %35 = vector.multi_reduction <add>, %34, %cst_16 [1, 2] : vector<1x8x1xf32> to vector<1xf32>
    %36 = vector.shape_cast %35 : vector<1xf32> to vector<1x1x1xf32>
    %37 = vector.extract %36[0, 0, 0] : f32 from vector<1x1x1xf32>
    %38 = vector.broadcast %37 : f32 to vector<1x1xf32>
    %39 = arith.addf %33, %38 : vector<1x1xf32>
    %c0_17 = arith.constant 0 : index
    %c0_18 = arith.constant 0 : index
    %40 = vector.load %arg7[%c0_17, %c0_18] : memref<1x1xf32, #tpu.memory_space<vmem>>, vector<1x1xf32>
    tpu.vector_store %arg7[%c0_17, %c0_18], %39 {strides = array<i32>} : memref<1x1xf32, #tpu.memory_space<vmem>>, vector<1x1xf32>,
    %c0_19 = arith.constant 0 : index
    %c0_20 = arith.constant 0 : index
    %41 = vector.load %arg4[%c0_19, %c0_20] : memref<1x8xf32, #tpu.memory_space<vmem>>, vector<1x8xf32>
    %cst_21 = arith.constant dense<0xFF800000> : vector<8xf32>
    %42 = vector.multi_reduction <maximumf>, %7, %cst_21 [0] : vector<8x8xf32> to vector<8xf32>
    %43 = vector.shape_cast %42 : vector<8xf32> to vector<1x8xf32>
    %44 = arith.maximumf %41, %43 : vector<1x8xf32>
    %c0_22 = arith.constant 0 : index
    %c0_23 = arith.constant 0 : index
    %45 = vector.load %arg5[%c0_22, %c0_23] : memref<1x8xf32, #tpu.memory_space<vmem>>, vector<1x8xf32>
    %46 = arith.subf %41, %44 : vector<1x8xf32>
    %47 = math.exp %46 : vector<1x8xf32>
    %48 = arith.mulf %45, %47 : vector<1x8xf32>
    %49 = vector.broadcast %44 : vector<1x8xf32> to vector<8x8xf32>
    %50 = arith.subf %7, %49 : vector<8x8xf32>
    %51 = math.exp %50 : vector<8x8xf32>
    %cst_24 = arith.constant dense<0.000000e+00> : vector<8xf32>
    %52 = vector.multi_reduction <add>, %51, %cst_24 [0] : vector<8x8xf32> to vector<8xf32>
    %53 = vector.shape_cast %52 : vector<8xf32> to vector<1x8xf32>
    %54 = arith.addf %48, %53 : vector<1x8xf32>
    %c0_25 = arith.constant 0 : index
    %c0_26 = arith.constant 0 : index
    %55 = vector.load %arg5[%c0_25, %c0_26] : memref<1x8xf32, #tpu.memory_space<vmem>>, vector<1x8xf32>
    tpu.vector_store %arg5[%c0_25, %c0_26], %54 {strides = array<i32>} : memref<1x8xf32, #tpu.memory_space<vmem>>, vector<1x8xf32>,
    %c0_27 = arith.constant 0 : index
    %c0_28 = arith.constant 0 : index
    %56 = vector.load %arg4[%c0_27, %c0_28] : memref<1x8xf32, #tpu.memory_space<vmem>>, vector<1x8xf32>
    tpu.vector_store %arg4[%c0_27, %c0_28], %44 {strides = array<i32>} : memref<1x8xf32, #tpu.memory_space<vmem>>, vector<1x8xf32>,
    %c0_i32_29 = arith.constant 0 : i32
    %57 = arith.cmpi eq, %arg0, %c0_i32_29 : i32
    %58 = arith.extui %57 : i1 to i32
    %c0_i32_30 = arith.constant 0 : i32
    %59 = arith.cmpi ne, %58, %c0_i32_30 : i32
    scf.if %59 {
      %c0_31 = arith.constant 0 : index
      %c0_32 = arith.constant 0 : index
      %60 = vector.load %arg6[%c0_31, %c0_32] : memref<1x1xf32, #tpu.memory_space<vmem>>, vector<1x1xf32>
      %61 = vector.shape_cast %60 : vector<1x1xf32> to vector<1x1x1xf32>
      %cst_33 = arith.constant dense<0.000000e+00> : vector<1xf32>
      %62 = vector.multi_reduction <add>, %61, %cst_33 [1, 2] : vector<1x1x1xf32> to vector<1xf32>
      %63 = vector.shape_cast %62 : vector<1xf32> to vector<1x1x1xf32>
      %64 = vector.extract %63[0, 0, 0] : f32 from vector<1x1x1xf32>
      %cst_34 = arith.constant 1.250000e-01 : f32
      %65 = arith.mulf %64, %cst_34 : f32
      %c0_35 = arith.constant 0 : index
      %c0_36 = arith.constant 0 : index
      %66 = vector.load %arg4[%c0_35, %c0_36] : memref<1x8xf32, #tpu.memory_space<vmem>>, vector<1x8xf32>
      %c0_37 = arith.constant 0 : index
      %c0_38 = arith.constant 0 : index
      %67 = vector.load %arg5[%c0_37, %c0_38] : memref<1x8xf32, #tpu.memory_space<vmem>>, vector<1x8xf32>
      %68 = math.log %67 : vector<1x8xf32>
      %69 = arith.addf %66, %68 : vector<1x8xf32>
      %70 = vector.shape_cast %69 : vector<1x8xf32> to vector<1x1x8xf32>
      %cst_39 = arith.constant dense<0.000000e+00> : vector<1xf32>
      %71 = vector.multi_reduction <add>, %70, %cst_39 [1, 2] : vector<1x1x8xf32> to vector<1xf32>
      %72 = vector.shape_cast %71 : vector<1xf32> to vector<1x1x1xf32>
      %73 = vector.extract %72[0, 0, 0] : f32 from vector<1x1x1xf32>
      %c0_40 = arith.constant 0 : index
      %c0_41 = arith.constant 0 : index
      %74 = vector.load %arg7[%c0_40, %c0_41] : memref<1x1xf32, #tpu.memory_space<vmem>>, vector<1x1xf32>
      %75 = vector.shape_cast %74 : vector<1x1xf32> to vector<1x1x1xf32>
      %cst_42 = arith.constant dense<0.000000e+00> : vector<1xf32>
      %76 = vector.multi_reduction <add>, %75, %cst_42 [1, 2] : vector<1x1x1xf32> to vector<1xf32>
      %77 = vector.shape_cast %76 : vector<1xf32> to vector<1x1x1xf32>
      %78 = vector.extract %77[0, 0, 0] : f32 from vector<1x1x1xf32>
      %79 = arith.subf %73, %78 : f32
      %cst_43 = arith.constant 1.250000e-01 : f32
      %80 = arith.mulf %79, %cst_43 : f32
      %81 = arith.addf %65, %80 : f32
      %cst_44 = arith.constant 5.000000e-01 : f32
      %82 = arith.mulf %cst_44, %81 : f32
      %c0_45 = arith.constant 0 : index
      %83 = memref.load %arg3[%c0_45] : memref<3xf32, #tpu.memory_space<smem>>
      memref.store %82, %arg3[%c0_45] : memref<3xf32, #tpu.memory_space<smem>>
      %c1 = arith.constant 1 : index
      %84 = memref.load %arg3[%c1] : memref<3xf32, #tpu.memory_space<smem>>
      memref.store %65, %arg3[%c1] : memref<3xf32, #tpu.memory_space<smem>>
      %c2 = arith.constant 2 : index
      %85 = memref.load %arg3[%c2] : memref<3xf32, #tpu.memory_space<smem>>
      memref.store %80, %arg3[%c2] : memref<3xf32, #tpu.memory_space<smem>>
    } else {
    }
    return
  }
  func.func @transform_0(%arg0: i32) -> (i32, i32) {
    %c0_i32 = arith.constant 0 : i32
    %c0_i32_0 = arith.constant 0 : i32
    return %arg0, %c0_i32 : i32, i32
  }
  func.func @transform_1(%arg0: i32) -> (i32, i32) {
    %c0_i32 = arith.constant 0 : i32
    %c0_i32_0 = arith.constant 0 : i32
    %c0_i32_1 = arith.constant 0 : i32
    return %c0_i32, %c0_i32_0 : i32, i32
  }
  func.func @transform_2(%arg0: i32) -> i32 {
    %c0_i32 = arith.constant 0 : i32
    %c0_i32_0 = arith.constant 0 : i32
    return %c0_i32 : i32
  }
}

</mosaic_0001>

<llo_original>
// kernel: ntxent_loss.1
$region0: #{ntxent_loss.1}
  #allocation0 [shape = 'u32[]', space=smem, size = 0x4, offset = 0x4, fixed_abs, tag = 'smem constant byte address 0x4 - core index']
  #allocation1 [shape = 'u32[72,128]{1,0:T(1,128)}', space=vmem, size = 0x9000, scoped, tag = 'internal scratch']
  #allocation2 [shape = 'f32[1,8]{1,0:T(1,128)}', space=vmem, size = 0x200, scoped, tag = 'scratch operand']
  #allocation3 [shape = 'f32[1,8]{1,0:T(1,128)}', space=vmem, size = 0x200, scoped, tag = 'scratch operand']
  #allocation4 [shape = 'f32[1,1]{1,0:T(1,128)}', space=vmem, size = 0x200, scoped, tag = 'scratch operand']
  #allocation5 [shape = 'f32[1,1]{1,0:T(1,128)}', space=vmem, size = 0x200, scoped, tag = 'scratch operand']
  %s0 = inlined_call_operand.hbm [shape: f32[8,32], index: 0, kind: input, shape index: {}]
  %s1 = inlined_call_operand.hbm [shape: f32[8,32], index: 1, kind: input, shape index: {}]
  %s2 = inlined_call_operand.vmem [shape: f32[3], index: 2, kind: output, shape index: {}]
  %s3 = sld [smem:[#allocation0]]
  $region34: #{ntxent_loss.1} parent=0
    _
  %s5 = ssub.s32 1, %s3
  %s6 = scalar_select 0, %s5, %s3
  $region1: #{ntxent_loss.1} parent=0
    #allocation6 [shape = 'u8[4096]{0}', space=vmem, size = 0x1000, scoped, tag = 'input window, operand 0, single buffered']
    #allocation7 [shape = 's32[1]{0}', space=sflag, size = 0x4, scoped, tag = 'scoped memory for ntxent_loss.1']
    #allocation8 [shape = 's32[1]{0}', space=sflag, size = 0x4, scoped, tag = 'scoped memory for ntxent_loss.1']
    #allocation9 [shape = 'u8[4096]{0}', space=vmem, size = 0x1000, scoped, tag = 'input window, operand 1, single buffered']
    #allocation10 [shape = 's32[1]{0}', space=sflag, size = 0x4, scoped, tag = 'scoped memory for ntxent_loss.1']
    #allocation11 [shape = 'u8[512]{0}', space=smem, size = 0x200, scoped, tag = 'output window, operand 0, single buffered']
    %7 = vsyncpa [#allocation7], 0
    %8 = vsyncpa [#allocation10], 0
    %9 = vsyncpa [#allocation8], 0
    // Predicated region
    $region2: #{ntxent_loss.1} parent=1 // pred_check
      _
    $region3: #{ntxent_loss.1} parent=1 // pred_check_branch
      %11 = sbr.rel (0) target = $region5
    $region4: #{ntxent_loss.1} parent=1 // pred_region
      %13 = vsyncadd [#allocation7], 0
      %s15 = sshll.u32 %s0, 4
      %s16 = int_to_ptr.hbm [resolvable:$true] %s15
      %s17 = sshll.u32 [#allocation6], 4
      %s18 = int_to_ptr.vmem [resolvable:$true] %s17
      %20 = dma.hbm_to_vmem [thread:$0]  %s16, 128, %s18, [#allocation7]
    $region5: #{ntxent_loss.1} parent=1 // pred_fallthru
      _
    // Predicated region
    $region6: #{ntxent_loss.1} parent=1 // pred_check
      _
    $region7: #{ntxent_loss.1} parent=1 // pred_check_branch
      %22 = sbr.rel (0) target = $region9
    $region8: #{ntxent_loss.1} parent=1 // pred_region
      %24 = vsyncadd [#allocation10], 0
      %s26 = sshll.u32 %s1, 4
      %s27 = int_to_ptr.hbm [resolvable:$true] %s26
      %s28 = sshll.u32 [#allocation9], 4
      %s29 = int_to_ptr.vmem [resolvable:$true] %s28
      %31 = dma.hbm_to_vmem [thread:$0]  %s27, 128, %s29, [#allocation10]
    $region9: #{ntxent_loss.1} parent=1 // pred_fallthru
      _
    // Predicated region
    $region10: #{ntxent_loss.1} parent=1 // pred_check
      _
    $region11: #{ntxent_loss.1} parent=1 // pred_check_branch
      %33 = sbr.rel (0) target = $region13
    $region12: #{ntxent_loss.1} parent=1 // pred_region
      %35 = dma.done [#allocation7], 128
    $region13: #{ntxent_loss.1} parent=1 // pred_fallthru
      _
    // Predicated region
    $region14: #{ntxent_loss.1} parent=1 // pred_check
      _
    $region15: #{ntxent_loss.1} parent=1 // pred_check_branch
      %37 = sbr.rel (0) target = $region17
    $region16: #{ntxent_loss.1} parent=1 // pred_region
      %39 = dma.done [#allocation10], 128
    $region17: #{ntxent_loss.1} parent=1 // pred_fallthru
      _
    %p40 = scmp.eq.s32.totalorder 0, 0
    // Predicated region
    $region18: #{ntxent_loss.1} parent=1 // pred_check
      %p41 = pneg %p40
    $region19: #{ntxent_loss.1} parent=1 // pred_check_branch
      %43 = sbr.rel (%p41) target = $region21
    $region20: #{ntxent_loss.1} parent=1 // pred_region
      %vm44 = vcmask 57344
      %45 = vst.msk [vmem:[#allocation2] sm:$0x1] %vm44, -inf
      %46 = vst.msk [vmem:[#allocation3] sm:$0x1] %vm44, 0.0
      %vm47 = vcmask 0
      %48 = vst.msk [vmem:[#allocation4] sm:$0x1] %vm47, 0.0
      %49 = vst.msk [vmem:[#allocation5] sm:$0x1] %vm47, 0.0
    $region21: #{ntxent_loss.1} parent=1 // pred_fallthru
      _
    %v50 = vld [vmem:[#allocation6] sm:$0xff]
    %v51 = vmul.f32 %v50, 14.285714
    %v52 = vld [vmem:[#allocation9] sm:$0xff]
    %vm53 = vcmask 261120
    %v55 = vsel %vm53, %v51, 0
    %v58 = vsel %vm53, %v52, 0
    %60 = vmatpush.xpose.msra.mxu0 0.0
    %61 = vmatpush.xpose.msra.mxu0 0.0
    %62 = vmatpush.xpose.msra.mxu0 0.0
    %63 = vmatpush.xpose.msra.mxu0 0.0
    %64 = vmatpush.xpose.msra.mxu0 0.0
    %65 = vmatpush.xpose.msra.mxu0 0.0
    %66 = vmatpush.xpose.msra.mxu0 0.0
    %67 = vmatpush.xpose.msra.mxu0 0.0
    %68 = vmatpush.xpose.msra.mxu0 0.0
    %69 = vmatpush.xpose.msra.mxu0 0.0
    %70 = vmatpush.xpose.msra.mxu0 0.0
    %71 = vmatpush.xpose.msra.mxu0 0.0
    %72 = vmatpush.xpose.msra.mxu0 0.0
    %73 = vmatpush.xpose.msra.mxu0 0.0
    %74 = vmatpush.xpose.msra.mxu0 0.0
    %75 = vmatpush.xpose.msra.mxu0 %v58
    %76 = vmatmul.f32.gmra.mxu0 %v55
    %v77 = vpop.f32.mrf.mxu0
    %v78 = vadd.f32 0.0, %v77
    %79 = vdwg.mxu0
    %s80 = smul.u32 0, 8
    %s81 = scalar_lea.vmem [#allocation9], %s80
    %v82 = vld [vmem:[%s81] sm:$0xff]
    %v83 = vmul.f32 %v51, %v82
    %v84 = vsel %vm53, %v83, 0.0
    %85 = vadd.xlane.f32.xlu0 %v84
    %v86 = vpop.xlane.xlu0 %85
    %vm87 = vcmask 64512
    %v88 = vsel %vm87, %v78, -inf
    %89 = vmax.xlane.f32.xlu0 %v88
    %v90 = vpop.xlane.xlu0 %89
    %v91 = vsub.f32 %v78, %v90
    %v92 = vmul.f32 %v91, 1.442695
    %v93 = vpow.pop %v92
    %v94 = vsel %vm87, %v93, 0.0
    %95 = vadd.xlane.f32.xlu0 %v94
    %v96 = vpop.xlane.xlu0 %95
    %v97 = vlog2.pop %v96
    %v98 = vmul.f32 %v97, 0.6931472
    %v99 = vadd.f32 %v90, %v98
    %v100 = vld [vmem:[#allocation4] sm:$0x1]
    %v101 = vsub.f32 %v99, %v86
    %vm102 = vcmask 7168
    %v103 = vsel %vm102, %v101, 0.0
    %104 = vadd.xlane.f32.xlu0 %v103
    %v105 = vpop.xlane.xlu0 %104
    %v106 = vrot.slane %v105, 4
    %v107 = vadd.f32 %v105, %v106
    %v108 = vrot.slane %v107, 2
    %v109 = vadd.f32 %v107, %v108
    %v110 = vrot.slane %v109, 1
    %v111 = vadd.f32 %v109, %v110
    %s112 = vtos %v111
    %v113 = vstv %s112
    %v114 = vadd.f32 %v100, %v113
    %vm115 = vcmask 0
    %116 = vst.msk [vmem:[#allocation4] sm:$0x1] %vm115, %v114
    %v117 = vld [vmem:[#allocation5] sm:$0x1]
    %v118 = vsel %vm102, %v86, 0.0
    %119 = vadd.xlane.f32.xlu0 %v118
    %v120 = vpop.xlane.xlu0 %119
    %v121 = vrot.slane %v120, 4
    %v122 = vadd.f32 %v120, %v121
    %v123 = vrot.slane %v122, 2
    %v124 = vadd.f32 %v122, %v123
    %v125 = vrot.slane %v124, 1
    %v126 = vadd.f32 %v124, %v125
    %s127 = vtos %v126
    %v128 = vstv %s127
    %v129 = vadd.f32 %v117, %v128
    %130 = vst.msk [vmem:[#allocation5] sm:$0x1] %vm115, %v129
    %v131 = vld [vmem:[#allocation2] sm:$0x1]
    %v132 = vrot.slane %v88, 4
    %v133 = vmax.f32 %v88, %v132
    %v134 = vrot.slane %v133, 2
    %v135 = vmax.f32 %v133, %v134
    %v136 = vrot.slane %v135, 1
    %v137 = vmax.f32 %v135, %v136
    %v138 = vmax.f32 %v131, %v137
    %v139 = vld [vmem:[#allocation3] sm:$0x1]
    %v140 = vsub.f32 %v131, %v138
    %v141 = vmul.f32 %v140, 1.442695
    %v142 = vpow.pop %v141
    %v143 = vmul.f32 %v139, %v142
    %v145 = vperm.slane %v138, 0
    %v147 = vsub.f32 %v78, %v145
    %v148 = vmul.f32 %v147, 1.442695
    %v149 = vpow.pop %v148
    %v150 = vsel %vm87, %v149, 0.0
    %v151 = vrot.slane %v150, 4
    %v152 = vadd.f32 %v150, %v151
    %v153 = vrot.slane %v152, 2
    %v154 = vadd.f32 %v152, %v153
    %v155 = vrot.slane %v154, 1
    %v156 = vadd.f32 %v154, %v155
    %v157 = vadd.f32 %v143, %v156
    %vm158 = vcmask 57344
    %159 = vst.msk [vmem:[#allocation3] sm:$0x1] %vm158, %v157
    %160 = vst.msk [vmem:[#allocation2] sm:$0x1] %vm158, %v138
    // Predicated region
    $region22: #{ntxent_loss.1} parent=1 // pred_check
      %p161 = pneg %p40
    $region23: #{ntxent_loss.1} parent=1 // pred_check_branch
      %163 = sbr.rel (%p161) target = $region25
    $region24: #{ntxent_loss.1} parent=1 // pred_region
      %v164 = vld [vmem:[#allocation4] sm:$0x1]
      %v165 = vadd.f32 %v164, 0.0
      %s166 = vtos %v165
      %s167 = smul.f32 %s166, 0.125
      %v168 = vld [vmem:[#allocation2] sm:$0x1]
      %v169 = vld [vmem:[#allocation3] sm:$0x1]
      %v170 = vlog2.pop %v169
      %v171 = vmul.f32 %v170, 0.6931472
      %v172 = vadd.f32 %v168, %v171
      %v173 = vsel %vm158, %v172, 0.0
      %174 = vadd.xlane.f32.xlu0 %v173
      %v175 = vpop.xlane.xlu0 %174
      %v176 = vrot.slane %v175, 4
      %v177 = vadd.f32 %v175, %v176
      %v178 = vrot.slane %v177, 2
      %v179 = vadd.f32 %v177, %v178
      %v180 = vrot.slane %v179, 1
      %v181 = vadd.f32 %v179, %v180
      %s182 = vtos %v181
      %v183 = vld [vmem:[#allocation5] sm:$0x1]
      %v184 = vadd.f32 %v183, 0.0
      %s185 = vtos %v184
      %s186 = ssub.f32 %s182, %s185
      %s187 = smul.f32 %s186, 0.125
      %s188 = sadd.f32 %s167, %s187
      %s189 = smul.f32 %s188, 0.5
      %s190 = scalar_lea.smem [#allocation11], 0
      %191 = sst [smem:[%s190]] %s189
      %s192 = scalar_lea.smem [#allocation11], 1
      %193 = sst [smem:[%s192]] %s167
      %s194 = scalar_lea.smem [#allocation11], 2
      %195 = sst [smem:[%s194]] %s187
    $region25: #{ntxent_loss.1} parent=1 // pred_fallthru
      _
    // Predicated region
    $region26: #{ntxent_loss.1} parent=1 // pred_check
      _
    $region27: #{ntxent_loss.1} parent=1 // pred_check_branch
      %197 = sbr.rel (0) target = $region29
    $region28: #{ntxent_loss.1} parent=1 // pred_region
      %199 = vsyncadd [#allocation8], 0
      %s201 = sshll.u32 %s2, 4
      %s202 = int_to_ptr.vmem [resolvable:$true] %s201
      %204 = dma.smem_to_vmem [#allocation11], 16, %s202, [#allocation8]
    $region29: #{ntxent_loss.1} parent=1 // pred_fallthru
      _
    // Predicated region
    $region30: #{ntxent_loss.1} parent=1 // pred_check
      _
    $region31: #{ntxent_loss.1} parent=1 // pred_check_branch
      %206 = sbr.rel (0) target = $region33
    $region32: #{ntxent_loss.1} parent=1 // pred_region
      %208 = dma.done [#allocation8], 16
    $region33: #{ntxent_loss.1} parent=1 // pred_fallthru
      _
    %209 = sfence
    %210 = vsyncpa [#allocation7], 1
    %211 = vsyncpa [#allocation10], 1
    %212 = vsyncpa [#allocation8], 1

</llo_original>
